<compile_context>
chip_gen: v7x
topology: tpu7x:2x2x1
jax: 0.10.0
libtpu: 0.0.40
codegen_flags: <defaults>
</compile_context>

<pallas_src>
import jax
import jax.numpy as jnp
from jax.experimental import pallas as pl
from jax.experimental.pallas import tpu as pltpu


def _round_up(n, m):
    return ((n + m - 1) // m) * m


def linear_kernel(xt_ref, w_ref, b_ref, o_ref):
    # xt_ref: (F, TM) feature-major activations      (VMEM, batch-tiled)
    # w_ref : (F, 1)  weight column                  (VMEM, resident across grid)
    # b_ref : (1, 1)  bias scalar                    (SMEM)
    # o_ref : (1, TM) lane-dense output slab         (VMEM)
    xt = xt_ref[...].astype(jnp.float32)
    w = w_ref[...].astype(jnp.float32)
    # VPU broadcast-multiply + sublane (XLU) reduce: 18 MACs per output column.
    y = jnp.sum(xt * w, axis=0, keepdims=True)            # (1, TM), f32
    o_ref[...] = (y + b_ref[0, 0]).astype(o_ref.dtype)


def linear_forward(x, weight, bias, *, tm=1024):
    """y = x @ weight.T + bias, matching torch.nn.Linear(18, 1).

    x: (B, F), weight: (O=1, F), bias: (O=1,). Returns (B, O).
    """
    B, F = x.shape
    O = weight.shape[0]
    assert weight.shape == (O, F) and bias.shape == (O,) and O == 1

    # Batch tile: multiple of 128 lanes; capped so tiny demo batches do not
    # over-pad, while large batches get the full TM for pipelined dense DMA.
    tm = min(tm, _round_up(B, 128))
    b_pad = _round_up(B, tm)

    # One-time wrapper-side relayout: feature-major, lane-dense, zero-padded.
    xt = jnp.transpose(x)                                  # (F, B)
    if b_pad != B:
        xt = jnp.pad(xt, ((0, 0), (0, b_pad - B)))         # (F, B_pad)
    w_col = jnp.transpose(weight)                          # (F, 1)
    b2d = bias.reshape(1, 1)

    out = pl.pallas_call(
        linear_kernel,
        out_shape=jax.ShapeDtypeStruct((1, b_pad), x.dtype),
        grid=(b_pad // tm,),
        in_specs=[
            pl.BlockSpec((F, tm), lambda i: (0, i)),       # batch-tiled activations
            pl.BlockSpec((F, O), lambda i: (0, 0)),        # weight: stays resident
            pl.BlockSpec(memory_space=pltpu.MemorySpace.SMEM),  # bias scalar
        ],
        out_specs=pl.BlockSpec((1, tm), lambda i: (0, i)),
        compiler_params=pltpu.CompilerParams(
            dimension_semantics=("parallel",),             # 2 TensorCores on v7x
        ),
    )(xt, w_col, b2d)

    return out[0, :B].reshape(B, O)


if __name__ == "__main__":
    key = jax.random.PRNGKey(0)
    kx, kw, kb = jax.random.split(key, 3)

    batch, in_features, out_features = 8, 18, 1

    x = jax.random.normal(kx, (batch, in_features), dtype=jnp.float32)
    # Deterministic parameter init (mimics nn.Linear uniform(-1/sqrt(fan_in), 1/sqrt(fan_in)))
    bound = 1.0 / (in_features ** 0.5)
    weight = jax.random.uniform(kw, (out_features, in_features),
                                minval=-bound, maxval=bound, dtype=jnp.float32)
    bias = jax.random.uniform(kb, (out_features,),
                              minval=-bound, maxval=bound, dtype=jnp.float32)

    y = linear_forward(x, weight, bias)
    jax.block_until_ready(y)

    # Cross-check against plain JAX reference
    y_ref = x @ weight.T + bias
    assert y.shape == (batch, out_features)
    assert jnp.allclose(y, y_ref, atol=1e-5, rtol=1e-5)

    print("KERNEL_OK")
</pallas_src>

<mosaic_0001>
module attributes {stable_mosaic.version = 11 : i64} {
  func.func @linear_kernel(%arg0: i32, %arg1: memref<18x128xf32, #tpu.memory_space<vmem>>, %arg2: memref<18x1xf32, #tpu.memory_space<vmem>>, %arg3: memref<1x1xf32, #tpu.memory_space<smem>>, %arg4: memref<1x128xf32, #tpu.memory_space<vmem>>) attributes {dimension_semantics = [#tpu.dimension_semantics<parallel>], iteration_bounds = array<i64: 1>, scalar_prefetch = 0 : i64, scratch_operands = 0 : i64, tpu.core_type = #tpu.core_type<tc>, window_params = [{transform_indices = @transform_0, window_bounds = array<i64: 18, 128>}, {pipeline_mode = #tpu.pipeline_mode<synchronous>, transform_indices = @transform_1, window_bounds = array<i64: 18, 1>}, {transform_indices = @transform_2, window_bounds = array<i64: 1, 1>}, {transform_indices = @transform_3, window_bounds = array<i64: 1, 128>}]} {
    %c0 = arith.constant 0 : index
    %c0_0 = arith.constant 0 : index
    %0 = vector.load %arg1[%c0, %c0_0] : memref<18x128xf32, #tpu.memory_space<vmem>>, vector<18x128xf32>
    %c0_1 = arith.constant 0 : index
    %c0_2 = arith.constant 0 : index
    %1 = vector.load %arg2[%c0_1, %c0_2] : memref<18x1xf32, #tpu.memory_space<vmem>>, vector<18x1xf32>
    %2 = vector.broadcast %1 : vector<18x1xf32> to vector<18x128xf32>
    %3 = arith.mulf %0, %2 : vector<18x128xf32>
    %cst = arith.constant dense<0.000000e+00> : vector<128xf32>
    %4 = vector.multi_reduction <add>, %3, %cst [0] : vector<18x128xf32> to vector<128xf32>
    %5 = vector.shape_cast %4 : vector<128xf32> to vector<1x128xf32>
    %c0_3 = arith.constant 0 : index
    %c0_4 = arith.constant 0 : index
    %6 = memref.load %arg3[%c0_3, %c0_4] : memref<1x1xf32, #tpu.memory_space<smem>>
    %7 = vector.broadcast %6 : f32 to vector<1x128xf32>
    %8 = arith.addf %5, %7 : vector<1x128xf32>
    %c0_5 = arith.constant 0 : index
    %c0_6 = arith.constant 0 : index
    %9 = vector.load %arg4[%c0_5, %c0_6] : memref<1x128xf32, #tpu.memory_space<vmem>>, vector<1x128xf32>
    tpu.vector_store %arg4[%c0_5, %c0_6], %8 {strides = array<i32>} : memref<1x128xf32, #tpu.memory_space<vmem>>, vector<1x128xf32>,
    return
  }
  func.func @transform_0(%arg0: i32) -> (i32, i32) {
    %c0_i32 = arith.constant 0 : i32
    %c0_i32_0 = arith.constant 0 : i32
    return %c0_i32, %arg0 : i32, i32
  }
  func.func @transform_1(%arg0: i32) -> (i32, i32) {
    %c0_i32 = arith.constant 0 : i32
    %c0_i32_0 = arith.constant 0 : i32
    %c0_i32_1 = arith.constant 0 : i32
    return %c0_i32, %c0_i32_0 : i32, i32
  }
  func.func @transform_2(%arg0: i32) -> (i32, i32) {
    %c0_i32 = arith.constant 0 : i32
    %c0_i32_0 = arith.constant 0 : i32
    %c0_i32_1 = arith.constant 0 : i32
    return %c0_i32, %c0_i32_0 : i32, i32
  }
  func.func @transform_3(%arg0: i32) -> (i32, i32) {
    %c0_i32 = arith.constant 0 : i32
    %c0_i32_0 = arith.constant 0 : i32
    return %c0_i32, %arg0 : i32, i32
  }
}

</mosaic_0001>

<llo_original>
// kernel: tpu_custom_call.1
$region0: #{tpu_custom_call.1}
  #allocation0 [shape = 'u32[]', space=smem, size = 0x4, offset = 0x4, fixed_abs, tag = 'smem constant byte address 0x4 - core index']
  #allocation1 [shape = 'u32[144,128]{1,0:T(1,128)}', space=vmem, size = 0x12000, scoped, tag = 'internal scratch']
  #allocation2 [shape = 'f32[1,1]{1,0:T(1,128)S(6)}', space=smem, size = 0x200, scoped, tag = 'scoped memory for tpu_custom_call.1']
  %s0 = inlined_call_operand.vmem [shape: f32[18,128], index: 0, kind: input, shape index: {}]
  %s1 = inlined_call_operand.vmem [shape: f32[18,1], index: 1, kind: input, shape index: {}]
  %s2 = inlined_call_operand.<no memory space> [shape: f32[1,1], index: 2, kind: input, shape index: {}]
  %s3 = inlined_call_operand.hbm [shape: f32[1,128], index: 3, kind: output, shape index: {}]
  %s4 = sld [smem:[#allocation0]]
  $region22: #{tpu_custom_call.1} parent=0
    _
  %s6 = ssub.s32 1, %s4
  %s7 = scalar_select 0, %s6, %s4
  %8 = sst [smem:[#allocation2]] %s2
  $region1: #{tpu_custom_call.1} parent=0
    #allocation3 [shape = 'u8[512]{0}', space=vmem, size = 0x400, scoped, tag = 'output window, operand 0, single buffered']
    #allocation4 [shape = 's32[1]{0}', space=sflag, size = 0x4, scoped, tag = 'scoped memory for tpu_custom_call.1']
    %9 = vsyncpa [#allocation4], 0
    // Predicated region
    $region2: #{tpu_custom_call.1} parent=1 // pred_check
      _
    $region3: #{tpu_custom_call.1} parent=1 // pred_check_branch
      %11 = sbr.rel (0) target = $region5
    $region4: #{tpu_custom_call.1} parent=1 // pred_region
      _
    $region5: #{tpu_custom_call.1} parent=1 // pred_fallthru
      _
    // Predicated region
    $region6: #{tpu_custom_call.1} parent=1 // pred_check
      _
    $region7: #{tpu_custom_call.1} parent=1 // pred_check_branch
      %13 = sbr.rel (0) target = $region9
    $region8: #{tpu_custom_call.1} parent=1 // pred_region
      _
    $region9: #{tpu_custom_call.1} parent=1 // pred_fallthru
      _
    // Predicated region
    $region10: #{tpu_custom_call.1} parent=1 // pred_check
      _
    $region11: #{tpu_custom_call.1} parent=1 // pred_check_branch
      %15 = sbr.rel (0) target = $region13
    $region12: #{tpu_custom_call.1} parent=1 // pred_region
      _
    $region13: #{tpu_custom_call.1} parent=1 // pred_fallthru
      _
    %v16 = vld [vmem:[%s0] sm:$0xff]
    %v17 = vld [vmem:[%s0 + $0x8] sm:$0xff]
    %v18 = vld [vmem:[%s0 + $0x10] sm:$0x3]
    %v19 = vld [vmem:[%s1] sm:$0xff]
    %v20 = vld [vmem:[%s1 + $0x8] sm:$0xff]
    %v21 = vld [vmem:[%s1 + $0x10] sm:$0x3]
    %23 = vset.pattern.permute.xlu0 0
    %24 = vperm.xlu0 %23, %v19
    %v25 = vpop.permute.xlu0 %24
    %28 = vset.pattern.permute.xlu0 0
    %29 = vperm.xlu0 %28, %v20
    %v30 = vpop.permute.xlu0 %29
    %33 = vset.pattern.permute.xlu0 0
    %34 = vperm.xlu0 %33, %v21
    %v35 = vpop.permute.xlu0 %34
    %v37 = vmul.f32 %v16, %v25
    %v38 = vmul.f32 %v17, %v30
    %v39 = vmul.f32 %v18, %v35
    %v40 = vadd.f32 %v37, %v38
    %vm41 = vcmask 1041408
    %v42 = vsel %vm41, %v39, 0.0
    %v43 = vadd.f32 %v40, %v42
    %v44 = vrot.slane %v43, 4
    %v45 = vadd.f32 %v43, %v44
    %v46 = vrot.slane %v45, 2
    %v47 = vadd.f32 %v45, %v46
    %v48 = vrot.slane %v47, 1
    %v49 = vadd.f32 %v47, %v48
    %s50 = sld [smem:[#allocation2]]
    %v51 = vstv %s50
    %v52 = vadd.f32 %v49, %v51
    %53 = vst [vmem:[#allocation3] sm:$0x1] %v52
    // Predicated region
    $region14: #{tpu_custom_call.1} parent=1 // pred_check
      _
    $region15: #{tpu_custom_call.1} parent=1 // pred_check_branch
      %55 = sbr.rel (0) target = $region17
    $region16: #{tpu_custom_call.1} parent=1 // pred_region
      %s57 = ssub.s32 16, 16
      %58 = vsyncadd [#allocation4], %s57
      %s60 = sshll.u32 [#allocation3], 4
      %s61 = int_to_ptr.vmem [resolvable:$true] %s60
      %63 = dma.vmem_to_hbm [thread:$0]  %s61, 16, %s3, [#allocation4]
    $region17: #{tpu_custom_call.1} parent=1 // pred_fallthru
      _
    // Predicated region
    $region18: #{tpu_custom_call.1} parent=1 // pred_check
      _
    $region19: #{tpu_custom_call.1} parent=1 // pred_check_branch
      %65 = sbr.rel (0) target = $region21
    $region20: #{tpu_custom_call.1} parent=1 // pred_region
      %66 = dma.done [#allocation4], 16
    $region21: #{tpu_custom_call.1} parent=1 // pred_fallthru
      _
    %67 = vsyncpa [#allocation4], 1

</llo_original>
